<compile_context>
chip_gen: v6e
topology: v6e:2x2x1
jax: 0.10.0
libtpu: 0.0.40
codegen_flags: <defaults>
</compile_context>

<pallas_src>
import math

import jax
import jax.numpy as jnp
from jax.experimental import pallas as pl
from jax.experimental.pallas import tpu as pltpu


def _layernorm(v, gamma, beta, eps=1e-5):
    mu = jnp.mean(v, axis=-1, keepdims=True)
    var = jnp.mean((v - mu) ** 2, axis=-1, keepdims=True)
    return (v - mu) * jax.lax.rsqrt(var + eps) * gamma + beta


# Single-buffered specs for operands whose block never changes across the grid.
def _const1(shape):
    nd = len(shape)
    return pl.BlockSpec(shape, lambda b: (0,) * nd, pipeline_mode=pl.Buffered(1))


def _const2(shape):
    nd = len(shape)
    return pl.BlockSpec(shape, lambda b, t: (0,) * nd, pipeline_mode=pl.Buffered(1))


def _clamp_vmem(est_bytes):
    # Conservative: never below 32 MiB (so a too-tight estimate can't fail the compile),
    # never above 64 MiB (v7x physical VMEM per TC).
    return int(min(64 << 20, max(32 << 20, 2 * est_bytes)))


def _default_q_tile(S, num_heads):
    # Prefer MXU-filling tiles (256+ on v6e/v7x); cap so the f32 softmax temporaries
    # (s/e/p + the attn output block) stay comfortably inside v7x's 64 MiB VMEM.
    for t in (512, 256, 128):
        if S % t == 0 and num_heads * t * S * 4 * 4 <= (24 << 20):
            return t
    return S


def make_kv_kernel(num_heads: int, head_dim: int):
    """Per-batch-element K/V projection, emitted in lane-dense (H, head_dim, S) bf16 layout."""

    def kernel(x_ref, wk_t, bk_c, wv_t, bv_c, kT_ref, vT_ref):
        S = x_ref.shape[1]
        xT = x_ref[0].T                                                       # (D, S) bf16
        k = jnp.dot(wk_t[...], xT, preferred_element_type=jnp.float32) + bk_c[...]
        v = jnp.dot(wv_t[...], xT, preferred_element_type=jnp.float32) + bv_c[...]
        # Split the leading (sublane-major) D axis into heads: cheap, no lane relayout.
        kT_ref[0] = k.astype(jnp.bfloat16).reshape(num_heads, head_dim, S)
        vT_ref[0] = v.astype(jnp.bfloat16).reshape(num_heads, head_dim, S)

    return kernel


def make_encoder_kernel(num_heads: int, head_dim: int):
    scale = 1.0 / math.sqrt(head_dim)
    d_model = num_heads * head_dim

    def kernel(xq_ref, mask_ref, kT_ref, vT_ref,
               wq, bq, wo, bo,
               g1, be1, w1, bf1, w2, bf2, g2, be2,
               out_ref, attn_ref):
        xq = xq_ref[0]                                                        # (tq, D) f32
        m = mask_ref[0]                                                       # (tq, S) bf16
        tq = xq.shape[0]

        # ---- Q projection; fold 1/sqrt(head_dim) into Q once ----
        q = jnp.dot(xq.astype(jnp.bfloat16), wq[...],
                    preferred_element_type=jnp.float32) + bq[...]
        qh = jnp.transpose((q * scale).astype(jnp.bfloat16)
                           .reshape(tq, num_heads, head_dim), (1, 0, 2))      # (H, tq, hd)

        kT = kT_ref[0]                                                        # (H, hd, S) bf16
        vT = vT_ref[0]                                                        # (H, hd, S) bf16

        # ---- scores for all heads in one batched MXU matmul; softmax in f32 ----
        s = jnp.einsum("hqd,hds->hqs", qh, kT,
                       preferred_element_type=jnp.float32)                    # (H, tq, S)
        s = jnp.where((m > 0.0)[None, :, :], s, jnp.float32(-1e9))
        s_max = jnp.max(s, axis=-1, keepdims=True)
        e = jnp.exp(s - s_max)
        inv_l = pl.reciprocal(jnp.sum(e, axis=-1, keepdims=True), approx=False)
        p = e * inv_l

        attn_ref[0] = p.astype(attn_ref.dtype)                                # bf16 writeback

        # ---- P @ V batched over heads (V kept lane-dense as (H, hd, S)) ----
        o = jnp.einsum("hqs,hds->hqd", p.astype(jnp.bfloat16), vT,
                       preferred_element_type=jnp.float32)                    # (H, tq, hd)
        concat = jnp.transpose(o.astype(jnp.bfloat16), (1, 0, 2)).reshape(tq, d_model)
        mhsa = jnp.dot(concat, wo[...], preferred_element_type=jnp.float32) + bo[...]

        # dropout1 (identity in eval) + residual + norm1 (f32)
        y1 = _layernorm(xq + mhsa, g1[...], be1[...])

        # ---- FFN: Linear -> ReLU -> Linear (bf16 operands, f32 accumulation) ----
        h = jnp.dot(y1.astype(jnp.bfloat16), w1[...],
                    preferred_element_type=jnp.float32) + bf1[...]
        h = jnp.maximum(h, 0.0)
        ffn = jnp.dot(h.astype(jnp.bfloat16), w2[...],
                      preferred_element_type=jnp.float32) + bf2[...]

        # dropout2 (identity in eval) + residual + norm2 (f32)
        out_ref[0] = _layernorm(y1 + ffn, g2[...], be2[...])

    return kernel


def prepare_params(p):
    """One-time (outside the step) packing of module params into kernel layouts/dtypes."""
    bf16 = lambda a: jnp.asarray(a, jnp.bfloat16)
    f32 = lambda a: jnp.asarray(a, jnp.float32)
    return {
        "wq": bf16(p["wq"]), "bq": f32(p["bq"]),
        "wk_t": bf16(p["wk"].T), "bk_c": f32(p["bk"]).reshape(-1, 1),
        "wv_t": bf16(p["wv"].T), "bv_c": f32(p["bv"]).reshape(-1, 1),
        "wo": bf16(p["wo"]), "bo": f32(p["bo"]),
        "g1": f32(p["g1"]), "be1": f32(p["be1"]),
        "w1": bf16(p["w1"]), "bf1": f32(p["bf1"]),
        "w2": bf16(p["w2"]), "bf2": f32(p["bf2"]),
        "g2": f32(p["g2"]), "be2": f32(p["be2"]),
    }


def encoder_block(x, mask, kp, num_heads, q_tile=None):
    """x: (B,S,D) f32; mask: (B,S,S), nonzero = keep; kp: output of prepare_params."""
    B, S, D = x.shape
    assert D % num_heads == 0
    hd = D // num_heads
    HID = kp["w1"].shape[1]

    if q_tile is None:
        q_tile = _default_q_tile(S, num_heads)
    tq = q_tile if S % q_tile == 0 else S
    n_qt = S // tq

    x_bf = x.astype(jnp.bfloat16)
    mask_bf = mask if mask.dtype == jnp.bfloat16 else mask.astype(jnp.bfloat16)

    # ---------------- K/V projection (per batch element, lane-dense per-head layout) -------
    kv_vmem = _clamp_vmem(
        2 * (2 * D * D * 2)            # wk_t / wv_t bf16 (single-buffered, + slack)
        + 2 * (S * D * 2)              # x block
        + 2 * 2 * (D * S * 2)          # kT / vT output blocks
        + 4 * (D * S * 4))             # f32 temporaries (xT, k, v) + headroom

    kT, vT = pl.pallas_call(
        make_kv_kernel(num_heads, hd),
        grid_spec=pltpu.PrefetchScalarGridSpec(
            num_scalar_prefetch=0,
            grid=(B,),
            in_specs=[
                pl.BlockSpec((1, S, D), lambda b: (b, 0, 0)),
                _const1((D, D)), _const1((D, 1)),          # wk^T, bk (column)
                _const1((D, D)), _const1((D, 1)),          # wv^T, bv (column)
            ],
            out_specs=(
                pl.BlockSpec((1, num_heads, hd, S), lambda b: (b, 0, 0, 0)),
                pl.BlockSpec((1, num_heads, hd, S), lambda b: (b, 0, 0, 0)),
            ),
        ),
        out_shape=(
            jax.ShapeDtypeStruct((B, num_heads, hd, S), jnp.bfloat16),
            jax.ShapeDtypeStruct((B, num_heads, hd, S), jnp.bfloat16),
        ),
        compiler_params=pltpu.CompilerParams(
            dimension_semantics=("parallel",),
            vmem_limit_bytes=kv_vmem,
        ),
    )(x_bf, kp["wk_t"], kp["bk_c"], kp["wv_t"], kp["bv_c"])

    # ---------------- main kernel: attention + FFN + LayerNorms, tiled over (B, q tiles) ----
    main_vmem = _clamp_vmem(
        (2 * D * D + D * HID + HID * D) * 2                # bf16 weights (single-buffered)
        + 16 * max(D, HID) * 4                             # biases / norm params (generous)
        + 2 * (tq * D * 4) + 2 * (tq * S * 2)              # x / mask blocks
        + 2 * 2 * (D * S * 2)                              # kT / vT blocks
        + 2 * (tq * D * 4) + 2 * (num_heads * tq * S * 2)  # out / attn blocks
        + 4 * (num_heads * tq * S * 4)                     # softmax temps (s, e, p) f32
        + 8 * (tq * max(D, HID) * 4))                      # projection / FFN temps

    cost = pl.CostEstimate(
        flops=2 * B * (2 * S * D * D + 2 * S * S * D + 2 * S * D * HID),
        transcendentals=B * num_heads * S * S,
        bytes_accessed=(B * S * D * 4 + B * S * S * 2 + 2 * B * D * S * 2
                        + (2 * D * D + 2 * D * HID) * 2
                        + B * num_heads * S * S * 2 + B * S * D * 4),
    )

    out, attn = pl.pallas_call(
        make_encoder_kernel(num_heads, hd),
        grid_spec=pltpu.PrefetchScalarGridSpec(
            num_scalar_prefetch=0,
            grid=(B, n_qt),
            in_specs=[
                pl.BlockSpec((1, tq, D), lambda b, t: (b, t, 0)),             # x q rows (f32)
                pl.BlockSpec((1, tq, S), lambda b, t: (b, t, 0)),             # mask rows (bf16)
                pl.BlockSpec((1, num_heads, hd, S), lambda b, t: (b, 0, 0, 0)),  # K^T
                pl.BlockSpec((1, num_heads, hd, S), lambda b, t: (b, 0, 0, 0)),  # V^T
                _const2((D, D)), _const2((1, D)),          # wq, bq
                _const2((D, D)), _const2((1, D)),          # wo, bo
                _const2((1, D)), _const2((1, D)),          # norm1 gamma, beta
                _const2((D, HID)), _const2((1, HID)),      # ffn w1, b1
                _const2((HID, D)), _const2((1, D)),        # ffn w2, b2
                _const2((1, D)), _const2((1, D)),          # norm2 gamma, beta
            ],
            out_specs=(
                pl.BlockSpec((1, tq, D), lambda b, t: (b, t, 0)),
                pl.BlockSpec((1, num_heads, tq, S), lambda b, t: (b, 0, t, 0)),
            ),
        ),
        out_shape=(
            jax.ShapeDtypeStruct((B, S, D), jnp.float32),
            jax.ShapeDtypeStruct((B, num_heads, S, S), jnp.bfloat16),
        ),
        compiler_params=pltpu.CompilerParams(
            # No cross-q-tile state anymore: both axes are independent.
            dimension_semantics=("parallel", "parallel"),
            vmem_limit_bytes=main_vmem,
        ),
        cost_estimate=cost,
    )(
        x, mask_bf, kT, vT,
        kp["wq"], kp["bq"], kp["wo"], kp["bo"],
        kp["g1"], kp["be1"],
        kp["w1"], kp["bf1"], kp["w2"], kp["bf2"],
        kp["g2"], kp["be2"],
    )
    return out, attn


def reference_encoder(x, mask, params, num_heads, bf16_matmuls=False):
    B, S, D = x.shape
    hd = D // num_heads
    scale = 1.0 / math.sqrt(hd)
    cast = (lambda a: a.astype(jnp.bfloat16)) if bf16_matmuls else (lambda a: a)

    def mm(a, b):
        return jnp.dot(cast(a), cast(b), preferred_element_type=jnp.float32)

    q = mm(x, params["wq"]) + params["bq"]
    k = mm(x, params["wk"]) + params["bk"]
    v = mm(x, params["wv"]) + params["bv"]
    q = (q * scale).reshape(B, S, num_heads, hd).transpose(0, 2, 1, 3)
    k = k.reshape(B, S, num_heads, hd).transpose(0, 2, 1, 3)
    v = v.reshape(B, S, num_heads, hd).transpose(0, 2, 1, 3)
    s = jnp.einsum("bhqd,bhkd->bhqk", cast(q), cast(k),
                   preferred_element_type=jnp.float32)
    s = jnp.where(mask[:, None, :, :] > 0.0, s, -1e9)
    p = jax.nn.softmax(s, axis=-1)
    o = jnp.einsum("bhqk,bhkd->bhqd", cast(p), cast(v),
                   preferred_element_type=jnp.float32)
    o = o.transpose(0, 2, 1, 3).reshape(B, S, D)
    mhsa = mm(o, params["wo"]) + params["bo"]

    def ln(v_, g, b):
        mu = jnp.mean(v_, -1, keepdims=True)
        var = jnp.mean((v_ - mu) ** 2, -1, keepdims=True)
        return (v_ - mu) / jnp.sqrt(var + 1e-5) * g + b

    y1 = ln(x + mhsa, params["g1"], params["be1"])
    h = jnp.maximum(mm(y1, params["w1"]) + params["bf1"], 0.0)
    ffn = mm(h, params["w2"]) + params["bf2"]
    return ln(y1 + ffn, params["g2"], params["be2"]), p


if __name__ == "__main__":
    # Lane-dense shapes (multiples of (8, 128) on the tiled axes); q_tile=128 gives two
    # q-tiles per batch element so the tiled mask / attn-output indexing is exercised.
    B, S, D, NH, HID = 2, 256, 128, 4, 256
    Q_TILE = 128

    keys = jax.random.split(jax.random.PRNGKey(0), 13)
    sc = 1.0 / math.sqrt(D)
    params = {
        "wq": jax.random.normal(keys[0], (D, D), jnp.float32) * sc,
        "bq": jax.random.normal(keys[1], (1, D), jnp.float32) * 0.01,
        "wk": jax.random.normal(keys[2], (D, D), jnp.float32) * sc,
        "bk": jax.random.normal(keys[3], (1, D), jnp.float32) * 0.01,
        "wv": jax.random.normal(keys[4], (D, D), jnp.float32) * sc,
        "bv": jax.random.normal(keys[5], (1, D), jnp.float32) * 0.01,
        "wo": jax.random.normal(keys[6], (D, D), jnp.float32) * sc,
        "bo": jax.random.normal(keys[7], (1, D), jnp.float32) * 0.01,
        "g1": jnp.ones((1, D), jnp.float32),
        "be1": jnp.zeros((1, D), jnp.float32),
        "w1": jax.random.normal(keys[8], (D, HID), jnp.float32) * sc,
        "bf1": jax.random.normal(keys[9], (1, HID), jnp.float32) * 0.01,
        "w2": jax.random.normal(keys[10], (HID, D), jnp.float32) * (1.0 / math.sqrt(HID)),
        "bf2": jax.random.normal(keys[11], (1, D), jnp.float32) * 0.01,
        "g2": jnp.ones((1, D), jnp.float32),
        "be2": jnp.zeros((1, D), jnp.float32),
    }

    x = jax.random.normal(keys[12], (B, S, D), jnp.float32)
    # causal-ish mask: keep lower triangle (nonzero = keep, 0 = masked)
    mask = jnp.tril(jnp.ones((S, S), jnp.float32))[None].repeat(B, axis=0)

    # One-time parameter packing (bf16 weights, transposed K/V weights, column biases).
    kparams = prepare_params(params)

    out, attn = encoder_block(x, mask, kparams, NH, q_tile=Q_TILE)
    out = jax.block_until_ready(out)
    attn = jax.block_until_ready(jax.device_get(attn).astype(jnp.float32))

    # Tight check vs. a reference that mirrors the kernel's bf16 matmul operands.
    ref_out_bf, ref_attn_bf = reference_encoder(x, mask, params, NH, bf16_matmuls=True)
    assert jnp.allclose(out, ref_out_bf, atol=3e-2, rtol=3e-2), "output mismatch (bf16 ref)"
    assert jnp.allclose(attn, ref_attn_bf, atol=3e-2, rtol=3e-2), "attn mismatch (bf16 ref)"

    # Looser sanity check vs. the full-f32 reference (module semantics).
    ref_out, ref_attn = reference_encoder(x, mask, params, NH, bf16_matmuls=False)
    assert jnp.allclose(out, ref_out, atol=1.5e-1, rtol=1.5e-1), "output mismatch (f32 ref)"
    assert jnp.allclose(attn, ref_attn, atol=1.5e-1, rtol=1.5e-1), "attn mismatch (f32 ref)"

    print("KERNEL_OK")
</pallas_src>

<mosaic_0001>
module attributes {stable_mosaic.version = 11 : i64} {
  func.func @kernel(%arg0: i32, %arg1: memref<1x256x128xbf16, #tpu.memory_space<vmem>>, %arg2: memref<128x128xbf16, #tpu.memory_space<vmem>>, %arg3: memref<128x1xf32, #tpu.memory_space<vmem>>, %arg4: memref<128x128xbf16, #tpu.memory_space<vmem>>, %arg5: memref<128x1xf32, #tpu.memory_space<vmem>>, %arg6: memref<1x4x32x256xbf16, #tpu.memory_space<vmem>>, %arg7: memref<1x4x32x256xbf16, #tpu.memory_space<vmem>>) attributes {dimension_semantics = [#tpu.dimension_semantics<parallel>], iteration_bounds = array<i64: 2>, scalar_prefetch = 0 : i64, scratch_operands = 0 : i64, tpu.core_type = #tpu.core_type<tc>, window_params = [{transform_indices = @transform_0, window_bounds = array<i64: 1, 256, 128>}, {pipeline_mode = #tpu.pipeline_mode<synchronous>, transform_indices = @transform_1, window_bounds = array<i64: 128, 128>}, {pipeline_mode = #tpu.pipeline_mode<synchronous>, transform_indices = @transform_2, window_bounds = array<i64: 128, 1>}, {pipeline_mode = #tpu.pipeline_mode<synchronous>, transform_indices = @transform_3, window_bounds = array<i64: 128, 128>}, {pipeline_mode = #tpu.pipeline_mode<synchronous>, transform_indices = @transform_4, window_bounds = array<i64: 128, 1>}, {transform_indices = @transform_5, window_bounds = array<i64: 1, 4, 32, 256>}, {transform_indices = @transform_6, window_bounds = array<i64: 1, 4, 32, 256>}]} {
    %c0 = arith.constant 0 : index
    %c0_0 = arith.constant 0 : index
    %c0_1 = arith.constant 0 : index
    %0 = vector.load %arg1[%c0, %c0_0, %c0_1] : memref<1x256x128xbf16, #tpu.memory_space<vmem>>, vector<1x256x128xbf16>
    %1 = vector.shape_cast %0 : vector<1x256x128xbf16> to vector<256x128xbf16>
    %2 = tpu.transpose %1, [1, 0] : vector<256x128xbf16> -> vector<128x256xbf16>
    %c0_2 = arith.constant 0 : index
    %c0_3 = arith.constant 0 : index
    %3 = vector.load %arg2[%c0_2, %c0_3] : memref<128x128xbf16, #tpu.memory_space<vmem>>, vector<128x128xbf16>
    %cst = arith.constant dense<0.000000e+00> : vector<128x256xf32>
    %4 = tpu.matmul %3, %2, %cst {dimension_numbers = #tpu.dot_dimension_numbers<[1], [0], [0], [1], [0, 0, 1, 1], [], []>} : vector<128x128xbf16>, vector<128x256xbf16>, vector<128x256xf32> -> vector<128x256xf32>
    %c0_4 = arith.constant 0 : index
    %c0_5 = arith.constant 0 : index
    %5 = vector.load %arg3[%c0_4, %c0_5] : memref<128x1xf32, #tpu.memory_space<vmem>>, vector<128x1xf32>
    %6 = vector.broadcast %5 : vector<128x1xf32> to vector<128x256xf32>
    %7 = arith.addf %4, %6 : vector<128x256xf32>
    %c0_6 = arith.constant 0 : index
    %c0_7 = arith.constant 0 : index
    %8 = vector.load %arg4[%c0_6, %c0_7] : memref<128x128xbf16, #tpu.memory_space<vmem>>, vector<128x128xbf16>
    %cst_8 = arith.constant dense<0.000000e+00> : vector<128x256xf32>
    %9 = tpu.matmul %8, %2, %cst_8 {dimension_numbers = #tpu.dot_dimension_numbers<[1], [0], [0], [1], [0, 0, 1, 1], [], []>} : vector<128x128xbf16>, vector<128x256xbf16>, vector<128x256xf32> -> vector<128x256xf32>
    %c0_9 = arith.constant 0 : index
    %c0_10 = arith.constant 0 : index
    %10 = vector.load %arg5[%c0_9, %c0_10] : memref<128x1xf32, #tpu.memory_space<vmem>>, vector<128x1xf32>
    %11 = vector.broadcast %10 : vector<128x1xf32> to vector<128x256xf32>
    %12 = arith.addf %9, %11 : vector<128x256xf32>
    %13 = arith.truncf %7 : vector<128x256xf32> to vector<128x256xbf16>
    %14 = vector.shape_cast %13 : vector<128x256xbf16> to vector<4x32x256xbf16>
    %c0_11 = arith.constant 0 : index
    %c0_12 = arith.constant 0 : index
    %c0_13 = arith.constant 0 : index
    %c0_14 = arith.constant 0 : index
    %15 = vector.load %arg6[%c0_11, %c0_12, %c0_13, %c0_14] : memref<1x4x32x256xbf16, #tpu.memory_space<vmem>>, vector<1x4x32x256xbf16>
    %16 = vector.shape_cast %15 : vector<1x4x32x256xbf16> to vector<4x32x256xbf16>
    %17 = vector.shape_cast %14 : vector<4x32x256xbf16> to vector<1x4x32x256xbf16>
    tpu.vector_store %arg6[%c0_11, %c0_12, %c0_13, %c0_14], %17 {strides = array<i32>} : memref<1x4x32x256xbf16, #tpu.memory_space<vmem>>, vector<1x4x32x256xbf16>,
    %18 = arith.truncf %12 : vector<128x256xf32> to vector<128x256xbf16>
    %19 = vector.shape_cast %18 : vector<128x256xbf16> to vector<4x32x256xbf16>
    %c0_15 = arith.constant 0 : index
    %c0_16 = arith.constant 0 : index
    %c0_17 = arith.constant 0 : index
    %c0_18 = arith.constant 0 : index
    %20 = vector.load %arg7[%c0_15, %c0_16, %c0_17, %c0_18] : memref<1x4x32x256xbf16, #tpu.memory_space<vmem>>, vector<1x4x32x256xbf16>
    %21 = vector.shape_cast %20 : vector<1x4x32x256xbf16> to vector<4x32x256xbf16>
    %22 = vector.shape_cast %19 : vector<4x32x256xbf16> to vector<1x4x32x256xbf16>
    tpu.vector_store %arg7[%c0_15, %c0_16, %c0_17, %c0_18], %22 {strides = array<i32>} : memref<1x4x32x256xbf16, #tpu.memory_space<vmem>>, vector<1x4x32x256xbf16>,
    return
  }
  func.func @transform_0(%arg0: i32) -> (i32, i32, i32) {
    %c0_i32 = arith.constant 0 : i32
    %c0_i32_0 = arith.constant 0 : i32
    %c0_i32_1 = arith.constant 0 : i32
    return %arg0, %c0_i32, %c0_i32_0 : i32, i32, i32
  }
  func.func @transform_1(%arg0: i32) -> (i32, i32) {
    %c0_i32 = arith.constant 0 : i32
    %c0_i32_0 = arith.constant 0 : i32
    %c0_i32_1 = arith.constant 0 : i32
    return %c0_i32, %c0_i32_0 : i32, i32
  }
  func.func @transform_2(%arg0: i32) -> (i32, i32) {
    %c0_i32 = arith.constant 0 : i32
    %c0_i32_0 = arith.constant 0 : i32
    %c0_i32_1 = arith.constant 0 : i32
    return %c0_i32, %c0_i32_0 : i32, i32
  }
  func.func @transform_3(%arg0: i32) -> (i32, i32) {
    %c0_i32 = arith.constant 0 : i32
    %c0_i32_0 = arith.constant 0 : i32
    %c0_i32_1 = arith.constant 0 : i32
    return %c0_i32, %c0_i32_0 : i32, i32
  }
  func.func @transform_4(%arg0: i32) -> (i32, i32) {
    %c0_i32 = arith.constant 0 : i32
    %c0_i32_0 = arith.constant 0 : i32
    %c0_i32_1 = arith.constant 0 : i32
    return %c0_i32, %c0_i32_0 : i32, i32
  }
  func.func @transform_5(%arg0: i32) -> (i32, i32, i32, i32) {
    %c0_i32 = arith.constant 0 : i32
    %c0_i32_0 = arith.constant 0 : i32
    %c0_i32_1 = arith.constant 0 : i32
    %c0_i32_2 = arith.constant 0 : i32
    return %arg0, %c0_i32, %c0_i32_0, %c0_i32_1 : i32, i32, i32, i32
  }
  func.func @transform_6(%arg0: i32) -> (i32, i32, i32, i32) {
    %c0_i32 = arith.constant 0 : i32
    %c0_i32_0 = arith.constant 0 : i32
    %c0_i32_1 = arith.constant 0 : i32
    %c0_i32_2 = arith.constant 0 : i32
    return %arg0, %c0_i32, %c0_i32_0, %c0_i32_1 : i32, i32, i32, i32
  }
}

</mosaic_0001>

<llo_original>
// kernel: tpu_custom_call.1
$region0: #{tpu_custom_call.1}
  #allocation0 [shape = 'u32[]', space=smem, size = 0x4, offset = 0x4, fixed_abs, tag = 'smem constant byte address 0x4 - core index']
  #allocation1 [shape = 'u32[144,128]{1,0:T(1,128)}', space=vmem, size = 0x12000, scoped, tag = 'internal scratch']
  %s0 = inlined_call_operand.vmem [shape: bf16[2,256,128], index: 0, kind: input, shape index: {}]
  %s1 = inlined_call_operand.hbm [shape: bf16[128,128], index: 1, kind: input, shape index: {}]
  %s2 = inlined_call_operand.vmem [shape: f32[128,1], index: 2, kind: input, shape index: {}]
  %s3 = inlined_call_operand.hbm [shape: bf16[128,128], index: 3, kind: input, shape index: {}]
  %s4 = inlined_call_operand.vmem [shape: f32[128,1], index: 4, kind: input, shape index: {}]
  %s5 = inlined_call_operand.hbm [shape: bf16[2,4,32,256], index: 5, kind: output, shape index: {0}]
  %s6 = inlined_call_operand.hbm [shape: bf16[2,4,32,256], index: 6, kind: output, shape index: {1}]
  %7 = xla_tuple %s5, %s6
  %s8 = sld [smem:[#allocation0]]
  $region69: #{tpu_custom_call.1} parent=0
    _
  %s10 = ssub.s32 1, %s8
  %s11 = scalar_select 0, %s10, %s8
  $region1: #{tpu_custom_call.1} parent=0
    #allocation2 [shape = 'u8[32768]{0}', space=vmem, size = 0x8000, scoped, tag = 'input window, operand 1, single buffered']
    #allocation3 [shape = 's32[2]{0}', space=sflag, size = 0x8, scoped, tag = 'scoped memory for tpu_custom_call.1']
    #allocation4 [shape = 's32[2]{0}', space=sflag, size = 0x8, scoped, tag = 'scoped memory for tpu_custom_call.1']
    #allocation5 [shape = 'u8[32768]{0}', space=vmem, size = 0x8000, scoped, tag = 'input window, operand 3, single buffered']
    #allocation6 [shape = 's32[1]{0}', space=sflag, size = 0x4, scoped, tag = 'scoped memory for tpu_custom_call.1']
    #allocation7 [shape = 'u8[131072]{0}', space=vmem, size = 0x20000, scoped, tag = 'output window, operand 0']
    #allocation8 [shape = 'u8[131072]{0}', space=vmem, size = 0x20000, scoped, tag = 'output window, operand 1']
    #allocation9 [shape = 's32[2]{0}', space=sflag, size = 0x8, scoped, tag = 'scoped memory for tpu_custom_call.1']
    %12 = vsyncpa [#allocation3], 0
    %13 = vsyncpa [#allocation6], 0
    %14 = vsyncpa [#allocation4], 0
    %s15 = scalar_lea.sflag [#allocation4], 1
    %16 = vsyncpa %s15, 0
    %17 = vsyncpa [#allocation9], 0
    %s18 = scalar_lea.sflag [#allocation9], 1
    %19 = vsyncpa %s18, 0
    loop: start=0, step=1, limit=4
    $region2: #{tpu_custom_call.1} parent=1 // loop_pre_header
      _
    $region3: #{tpu_custom_call.1} parent=1 // loop_header
      %s21 = sphi 0, %s25
      %p22 = scmp.ge.s32.totalorder %s21, 4
      %s31 = sphi 0, %s33
      %s34 = sphi 0, %s31
      %s35 = sphi 0, %s34
      %s51 = sphi 0, %s35
      %s55 = sphi 0, %s55
      %s57 = sphi 0, %s55
      %s58 = sphi 0, %s57
      %s72 = sphi 0, %s58
      %s76 = sphi 0, %s76
      %s78 = sphi 0, %s76
      %s79 = sphi 0, %s78
      %s93 = sphi 0, %s79
      %s97 = sphi 0, %s97
      %s99 = sphi 0, %s97
      %s100 = sphi 0, %s99
      %s114 = sphi 0, %s100
      %s118 = sphi 0, %s118
      %s120 = sphi 0, %s118
      %s121 = sphi 0, %s120
      %s135 = sphi 0, %s121
      %s141 = sphi 0, %s143
      %s144 = sphi 0, %s141
      %s145 = sphi 0, %s144
      %s161 = sphi 0, %s145
      %s167 = sphi 0, %s169
      %s170 = sphi 0, %s167
      %s171 = sphi 0, %s170
      %s187 = sphi 0, %s171
    $region4: #{tpu_custom_call.1} parent=1 // loop_header_branch
      %24 = sbr.rel (%p22) target = $region8
    $region5: #{tpu_custom_call.1} parent=1 // loop_body
      %s26 = ssub.s32 %s21, 1
      %s27 = ssub.s32 %s21, 2
      %s28 = sadd.s32 %s21, 1
      %s29 = ssub.s32 %s21, %s28
      %p30 = scmp.eq.s32.totalorder %s29, 0
      %s32 = sadd.s32 %s31, 1
      %s33 = scalar_select %p30, %s31, %s32
      %p36 = pneg %p30
      %p37 = scmp.eq.s32.totalorder %s21, 1
      %p38 = por %p36, %p37
      %p39 = scmp.ne.s32.totalorder %s31, %s34
      %p40 = scmp.eq.s32.totalorder %s21, 0
      %p41 = por %p39, %p40
      %p42 = scmp.ne.s32.totalorder %s31, %s34
      %p43 = scmp.eq.s32.totalorder %s26, 1
      %p44 = por %p42, %p43
      %p45 = scmp.ne.s32.totalorder %s34, %s35
      %p46 = scmp.eq.s32.totalorder %s26, 0
      %p47 = por %p45, %p46
      %p48 = scmp.ne.s32.totalorder %s34, %s35
      %p49 = scmp.eq.s32.totalorder %s27, 1
      %p50 = por %p48, %p49
      %p52 = scmp.ne.s32.totalorder %s35, %s51
      %p53 = scmp.eq.s32.totalorder %s27, 0
      %p54 = por %p52, %p53
      %s56 = sadd.s32 %s55, 1
      %p59 = scmp.eq.s32.totalorder %s21, 1
      %p60 = scmp.ne.s32.totalorder %s55, %s57
      %p61 = scmp.eq.s32.totalorder %s21, 0
      %p62 = por %p60, %p61
      %p63 = scmp.ne.s32.totalorder %s55, %s57
      %p64 = scmp.eq.s32.totalorder %s26, 1
      %p65 = por %p63, %p64
      %p66 = scmp.ne.s32.totalorder %s57, %s58
      %p67 = scmp.eq.s32.totalorder %s26, 0
      %p68 = por %p66, %p67
      %p69 = scmp.ne.s32.totalorder %s57, %s58
      %p70 = scmp.eq.s32.totalorder %s27, 1
      %p71 = por %p69, %p70
      %p73 = scmp.ne.s32.totalorder %s58, %s72
      %p74 = scmp.eq.s32.totalorder %s27, 0
      %p75 = por %p73, %p74
      %s77 = sadd.s32 %s76, 1
      %p80 = scmp.eq.s32.totalorder %s21, 1
      %p81 = scmp.ne.s32.totalorder %s76, %s78
      %p82 = scmp.eq.s32.totalorder %s21, 0
      %p83 = por %p81, %p82
      %p84 = scmp.ne.s32.totalorder %s76, %s78
      %p85 = scmp.eq.s32.totalorder %s26, 1
      %p86 = por %p84, %p85
      %p87 = scmp.ne.s32.totalorder %s78, %s79
      %p88 = scmp.eq.s32.totalorder %s26, 0
      %p89 = por %p87, %p88
      %p90 = scmp.ne.s32.totalorder %s78, %s79
      %p91 = scmp.eq.s32.totalorder %s27, 1
      %p92 = por %p90, %p91
      %p94 = scmp.ne.s32.totalorder %s79, %s93
      %p95 = scmp.eq.s32.totalorder %s27, 0
      %p96 = por %p94, %p95
      %s98 = sadd.s32 %s97, 1
      %p101 = scmp.eq.s32.totalorder %s21, 1
      %p102 = scmp.ne.s32.totalorder %s97, %s99
      %p103 = scmp.eq.s32.totalorder %s21, 0
      %p104 = por %p102, %p103
      %p105 = scmp.ne.s32.totalorder %s97, %s99
      %p106 = scmp.eq.s32.totalorder %s26, 1
      %p107 = por %p105, %p106
      %p108 = scmp.ne.s32.totalorder %s99, %s100
      %p109 = scmp.eq.s32.totalorder %s26, 0
      %p110 = por %p108, %p109
      %p111 = scmp.ne.s32.totalorder %s99, %s100
      %p112 = scmp.eq.s32.totalorder %s27, 1
      %p113 = por %p111, %p112
      %p115 = scmp.ne.s32.totalorder %s100, %s114
      %p116 = scmp.eq.s32.totalorder %s27, 0
      %p117 = por %p115, %p116
      %s119 = sadd.s32 %s118, 1
      %p122 = scmp.eq.s32.totalorder %s21, 1
      %p123 = scmp.ne.s32.totalorder %s118, %s120
      %p124 = scmp.eq.s32.totalorder %s21, 0
      %p125 = por %p123, %p124
      %p126 = scmp.ne.s32.totalorder %s118, %s120
      %p127 = scmp.eq.s32.totalorder %s26, 1
      %p128 = por %p126, %p127
      %p129 = scmp.ne.s32.totalorder %s120, %s121
      %p130 = scmp.eq.s32.totalorder %s26, 0
      %p131 = por %p129, %p130
      %p132 = scmp.ne.s32.totalorder %s120, %s121
      %p133 = scmp.eq.s32.totalorder %s27, 1
      %p134 = por %p132, %p133
      %p136 = scmp.ne.s32.totalorder %s121, %s135
      %p137 = scmp.eq.s32.totalorder %s27, 0
      %p138 = por %p136, %p137
      %s139 = ssub.s32 %s21, %s28
      %p140 = scmp.eq.s32.totalorder %s139, 0
      %s142 = sadd.s32 %s141, 1
      %s143 = scalar_select %p140, %s141, %s142
      %p146 = pneg %p140
      %p147 = scmp.eq.s32.totalorder %s21, 1
      %p148 = por %p146, %p147
      %p149 = scmp.ne.s32.totalorder %s141, %s144
      %p150 = scmp.eq.s32.totalorder %s21, 0
      %p151 = por %p149, %p150
      %p152 = scmp.ne.s32.totalorder %s141, %s144
      %p153 = scmp.eq.s32.totalorder %s26, 1
      %p154 = por %p152, %p153
      %p155 = scmp.ne.s32.totalorder %s144, %s145
      %p156 = scmp.eq.s32.totalorder %s26, 0
      %p157 = por %p155, %p156
      %p158 = scmp.ne.s32.totalorder %s144, %s145
      %p159 = scmp.eq.s32.totalorder %s27, 1
      %p160 = por %p158, %p159
      %p162 = scmp.ne.s32.totalorder %s145, %s161
      %p163 = scmp.eq.s32.totalorder %s27, 0
      %p164 = por %p162, %p163
      %s165 = ssub.s32 %s21, %s28
      %p166 = scmp.eq.s32.totalorder %s165, 0
      %s168 = sadd.s32 %s167, 1
      %s169 = scalar_select %p166, %s167, %s168
      %p172 = pneg %p166
      %p173 = scmp.eq.s32.totalorder %s21, 1
      %p174 = por %p172, %p173
      %p175 = scmp.ne.s32.totalorder %s167, %s170
      %p176 = scmp.eq.s32.totalorder %s21, 0
      %p177 = por %p175, %p176
      %p178 = scmp.ne.s32.totalorder %s167, %s170
      %p179 = scmp.eq.s32.totalorder %s26, 1
      %p180 = por %p178, %p179
      %p181 = scmp.ne.s32.totalorder %s170, %s171
      %p182 = scmp.eq.s32.totalorder %s26, 0
      %p183 = por %p181, %p182
      %p184 = scmp.ne.s32.totalorder %s170, %s171
      %p185 = scmp.eq.s32.totalorder %s27, 1
      %p186 = por %p184, %p185
      %p188 = scmp.ne.s32.totalorder %s171, %s187
      %p189 = scmp.eq.s32.totalorder %s27, 0
      %p190 = por %p188, %p189
      %p191 = scmp.le.s32.totalorder 1, %s21
      %p192 = scmp.lt.s32.totalorder %s21, 3
      %p193 = pnand %p191, %p192
      %p194 = pneg %p193
      // Predicated region
      $region9: #{tpu_custom_call.1} parent=5 // pred_check
        _
      $region10: #{tpu_custom_call.1} parent=5 // pred_check_branch
        %196 = sbr.rel (%p193) target = $region12
      $region11: #{tpu_custom_call.1} parent=5 // pred_region
        %s197 = ssub.s32 %s21, 1
        // Predicated region
        $region13: #{tpu_custom_call.1} parent=11 // pred_check
          %p198 = pneg %p68
        $region14: #{tpu_custom_call.1} parent=11 // pred_check_branch
          %200 = sbr.rel (%p198) target = $region16
        $region15: #{tpu_custom_call.1} parent=11 // pred_region
          %s202 = ssub.s32 1024, 1024
          %203 = vsyncadd [#allocation3], %s202
          %s204 = sshll.u32 [#allocation2], 4
          %s205 = int_to_ptr.vmem [resolvable:$true] %s204
          %210 = dma.hbm_to_vmem [thread:$0]  %s1, 1024, %s205, [#allocation3], 64, 64, 4
        $region16: #{tpu_custom_call.1} parent=11 // pred_fallthru
          _
        // Predicated region
        $region17: #{tpu_custom_call.1} parent=11 // pred_check
          %p211 = pneg %p89
        $region18: #{tpu_custom_call.1} parent=11 // pred_check_branch
          %213 = sbr.rel (%p211) target = $region20
        $region19: #{tpu_custom_call.1} parent=11 // pred_region
          _
        $region20: #{tpu_custom_call.1} parent=11 // pred_fallthru
          _
        // Predicated region
        $region21: #{tpu_custom_call.1} parent=11 // pred_check
          %p214 = pneg %p110
        $region22: #{tpu_custom_call.1} parent=11 // pred_check_branch
          %216 = sbr.rel (%p214) target = $region24
        $region23: #{tpu_custom_call.1} parent=11 // pred_region
          %s218 = ssub.s32 1024, 1024
          %219 = vsyncadd [#allocation6], %s218
          %s220 = sshll.u32 [#allocation5], 4
          %s221 = int_to_ptr.vmem [resolvable:$true] %s220
          %226 = dma.hbm_to_vmem [thread:$0]  %s3, 1024, %s221, [#allocation6], 64, 64, 4
        $region24: #{tpu_custom_call.1} parent=11 // pred_fallthru
          _
        // Predicated region
        $region25: #{tpu_custom_call.1} parent=11 // pred_check
          %p227 = pneg %p131
        $region26: #{tpu_custom_call.1} parent=11 // pred_check_branch
          %229 = sbr.rel (%p227) target = $region28
        $region27: #{tpu_custom_call.1} parent=11 // pred_region
          _
        $region28: #{tpu_custom_call.1} parent=11 // pred_fallthru
          _
      $region12: #{tpu_custom_call.1} parent=5 // pred_fallthru
        _
      %p230 = scmp.lt.s32.totalorder %s21, 2
      // Predicated region
      $region29: #{tpu_custom_call.1} parent=5 // pred_check
        %p231 = pneg %p230
      $region30: #{tpu_custom_call.1} parent=5 // pred_check_branch
        %233 = sbr.rel (%p231) target = $region32
      $region31: #{tpu_custom_call.1} parent=5 // pred_region
        // Predicated region
        $region33: #{tpu_custom_call.1} parent=31 // pred_check
          %p234 = pneg %p41
        $region34: #{tpu_custom_call.1} parent=31 // pred_check_branch
          %236 = sbr.rel (%p234) target = $region36
        $region35: #{tpu_custom_call.1} parent=31 // pred_region
          %p237 = scmp.lt.s32.totalorder %s21, 1
          %s238 = scalar_select %p237, %s21, 1
          %s239 = smul.addr %s238, 32
          %s240 = smul.addr %s239, 4
          %s241 = scalar_lea.vmem %s0, %s240
        $region36: #{tpu_custom_call.1} parent=31 // pred_fallthru
          _
      $region32: #{tpu_custom_call.1} parent=5 // pred_fallthru
        _
      %p242 = scmp.le.s32.totalorder 1, %s21
      %p243 = scmp.lt.s32.totalorder %s21, 3
      %p244 = pnand %p242, %p243
      %p245 = pneg %p244
      // Predicated region
      $region37: #{tpu_custom_call.1} parent=5 // pred_check
        _
      $region38: #{tpu_custom_call.1} parent=5 // pred_check_branch
        %247 = sbr.rel (%p244) target = $region40
      $region39: #{tpu_custom_call.1} parent=5 // pred_region
        %s248 = ssub.s32 %s21, 1
        // Predicated region
        $region41: #{tpu_custom_call.1} parent=39 // pred_check
          %p249 = pneg %p68
        $region42: #{tpu_custom_call.1} parent=39 // pred_check_branch
          %251 = sbr.rel (%p249) target = $region44
        $region43: #{tpu_custom_call.1} parent=39 // pred_region
          %252 = dma.done [#allocation3], 1024
        $region44: #{tpu_custom_call.1} parent=39 // pred_fallthru
          _
        // Predicated region
        $region45: #{tpu_custom_call.1} parent=39 // pred_check
          %p253 = pneg %p110
        $region46: #{tpu_custom_call.1} parent=39 // pred_check_branch
          %255 = sbr.rel (%p253) target = $region48
        $region47: #{tpu_custom_call.1} parent=39 // pred_region
          %256 = dma.done [#allocation6], 1024
        $region48: #{tpu_custom_call.1} parent=39 // pred_fallthru
          _
        %p257 = scmp.lt.s32.totalorder %s26, 1
        %s258 = scalar_select %p257, %s26, 1
        %s259 = smul.addr %s258, 32
        %s260 = smul.addr %s259, 4
        %s261 = scalar_lea.vmem %s0, %s260
        %p262 = pneg %p47
        %p263 = pneg %p44
        %p264 = pneg %p68
        %p265 = pneg %p65
        %p266 = pneg %p89
        %p267 = pneg %p86
        %p268 = pneg %p110
        %p269 = pneg %p107
        %p270 = pneg %p131
        %p271 = pneg %p128
        %p272 = pneg %p157
        %p273 = pneg %p154
        %s274 = sand.u32 %s144, 1
        %s275 = scalar_lea.sflag [#allocation4], %s274
        %s276 = sand.u32 %s144, 1
        %s277 = smul.addr %s276, 128
        %s278 = scalar_lea.vmem [#allocation7], %s277
        %p279 = pneg %p183
        %p280 = pneg %p180
        %s281 = sand.u32 %s170, 1
        %s282 = scalar_lea.sflag [#allocation9], %s281
        %s283 = sand.u32 %s170, 1
        %s284 = smul.addr %s283, 128
        %s285 = scalar_lea.vmem [#allocation8], %s284
        %p286 = scmp.lt.s32.totalorder %s26, 1
        %s287 = scalar_select %p286, %s26, 1
        %s288 = smul.addr %s287, 32
        %s289 = smul.addr %s288, 4
        %s290 = scalar_lea.vmem %s0, %s289
        %v292 = vld [vmem:[%s290] sm:$0xf]
        %v293 = vld [vmem:[%s290 + $0x4] sm:$0xf]
        %v294 = vld [vmem:[%s290 + $0x8] sm:$0xf]
        %v295 = vld [vmem:[%s290 + $0xc] sm:$0xf]
        %v296 = vld [vmem:[%s290 + $0x10] sm:$0xf]
        %v297 = vld [vmem:[%s290 + $0x14] sm:$0xf]
        %v298 = vld [vmem:[%s290 + $0x18] sm:$0xf]
        %v299 = vld [vmem:[%s290 + $0x1c] sm:$0xf]
        %v300 = vld [vmem:[%s290 + $0x20] sm:$0xf]
        %v301 = vld [vmem:[%s290 + $0x24] sm:$0xf]
        %v302 = vld [vmem:[%s290 + $0x28] sm:$0xf]
        %v303 = vld [vmem:[%s290 + $0x2c] sm:$0xf]
        %v304 = vld [vmem:[%s290 + $0x30] sm:$0xf]
        %v305 = vld [vmem:[%s290 + $0x34] sm:$0xf]
        %v306 = vld [vmem:[%s290 + $0x38] sm:$0xf]
        %v307 = vld [vmem:[%s290 + $0x3c] sm:$0xf]
        %v308 = vld [vmem:[%s290 + $0x40] sm:$0xf]
        %v309 = vld [vmem:[%s290 + $0x44] sm:$0xf]
        %v310 = vld [vmem:[%s290 + $0x48] sm:$0xf]
        %v311 = vld [vmem:[%s290 + $0x4c] sm:$0xf]
        %v312 = vld [vmem:[%s290 + $0x50] sm:$0xf]
        %v313 = vld [vmem:[%s290 + $0x54] sm:$0xf]
        %v314 = vld [vmem:[%s290 + $0x58] sm:$0xf]
        %v315 = vld [vmem:[%s290 + $0x5c] sm:$0xf]
        %v316 = vld [vmem:[%s290 + $0x60] sm:$0xf]
        %v317 = vld [vmem:[%s290 + $0x64] sm:$0xf]
        %v318 = vld [vmem:[%s290 + $0x68] sm:$0xf]
        %v319 = vld [vmem:[%s290 + $0x6c] sm:$0xf]
        %v320 = vld [vmem:[%s290 + $0x70] sm:$0xf]
        %v321 = vld [vmem:[%s290 + $0x74] sm:$0xf]
        %v322 = vld [vmem:[%s290 + $0x78] sm:$0xf]
        %v323 = vld [vmem:[%s290 + $0x7c] sm:$0xf]
        %v324 = vld [vmem:[#allocation2] sm:$0xf]
        %v325 = vld [vmem:[#allocation2 + $0x4] sm:$0xf]
        %v326 = vld [vmem:[#allocation2 + $0x8] sm:$0xf]
        %v327 = vld [vmem:[#allocation2 + $0xc] sm:$0xf]
        %v328 = vld [vmem:[#allocation2 + $0x10] sm:$0xf]
        %v329 = vld [vmem:[#allocation2 + $0x14] sm:$0xf]
        %v330 = vld [vmem:[#allocation2 + $0x18] sm:$0xf]
        %v331 = vld [vmem:[#allocation2 + $0x1c] sm:$0xf]
        %v332 = vld [vmem:[#allocation2 + $0x20] sm:$0xf]
        %v333 = vld [vmem:[#allocation2 + $0x24] sm:$0xf]
        %v334 = vld [vmem:[#allocation2 + $0x28] sm:$0xf]
        %v335 = vld [vmem:[#allocation2 + $0x2c] sm:$0xf]
        %v336 = vld [vmem:[#allocation2 + $0x30] sm:$0xf]
        %v337 = vld [vmem:[#allocation2 + $0x34] sm:$0xf]
        %v338 = vld [vmem:[#allocation2 + $0x38] sm:$0xf]
        %v339 = vld [vmem:[#allocation2 + $0x3c] sm:$0xf]
        %v340 = vld [vmem:[%s2] sm:$0xff]
        %v341 = vld [vmem:[%s2 + $0x8] sm:$0xff]
        %v342 = vld [vmem:[%s2 + $0x10] sm:$0xff]
        %v343 = vld [vmem:[%s2 + $0x18] sm:$0xff]
        %v344 = vld [vmem:[%s2 + $0x20] sm:$0xff]
        %v345 = vld [vmem:[%s2 + $0x28] sm:$0xff]
        %v346 = vld [vmem:[%s2 + $0x30] sm:$0xff]
        %v347 = vld [vmem:[%s2 + $0x38] sm:$0xff]
        %v348 = vld [vmem:[%s2 + $0x40] sm:$0xff]
        %v349 = vld [vmem:[%s2 + $0x48] sm:$0xff]
        %v350 = vld [vmem:[%s2 + $0x50] sm:$0xff]
        %v351 = vld [vmem:[%s2 + $0x58] sm:$0xff]
        %v352 = vld [vmem:[%s2 + $0x60] sm:$0xff]
        %v353 = vld [vmem:[%s2 + $0x68] sm:$0xff]
        %v354 = vld [vmem:[%s2 + $0x70] sm:$0xff]
        %v355 = vld [vmem:[%s2 + $0x78] sm:$0xff]
        %357 = vset.pattern.permute.xlu0 0
        %358 = vperm.xlu0 %357, %v340
        %v359 = vpop.permute.xlu0 %358
        %362 = vset.pattern.permute.xlu0 0
        %363 = vperm.xlu0 %362, %v341
        %v364 = vpop.permute.xlu0 %363
        %367 = vset.pattern.permute.xlu0 0
        %368 = vperm.xlu0 %367, %v342
        %v369 = vpop.permute.xlu0 %368
        %372 = vset.pattern.permute.xlu0 0
        %373 = vperm.xlu0 %372, %v343
        %v374 = vpop.permute.xlu0 %373
        %377 = vset.pattern.permute.xlu0 0
        %378 = vperm.xlu0 %377, %v344
        %v379 = vpop.permute.xlu0 %378
        %382 = vset.pattern.permute.xlu0 0
        %383 = vperm.xlu0 %382, %v345
        %v384 = vpop.permute.xlu0 %383
        %387 = vset.pattern.permute.xlu0 0
        %388 = vperm.xlu0 %387, %v346
        %v389 = vpop.permute.xlu0 %388
        %392 = vset.pattern.permute.xlu0 0
        %393 = vperm.xlu0 %392, %v347
        %v394 = vpop.permute.xlu0 %393
        %397 = vset.pattern.permute.xlu0 0
        %398 = vperm.xlu0 %397, %v348
        %v399 = vpop.permute.xlu0 %398
        %402 = vset.pattern.permute.xlu0 0
        %403 = vperm.xlu0 %402, %v349
        %v404 = vpop.permute.xlu0 %403
        %407 = vset.pattern.permute.xlu0 0
        %408 = vperm.xlu0 %407, %v350
        %v409 = vpop.permute.xlu0 %408
        %412 = vset.pattern.permute.xlu0 0
        %413 = vperm.xlu0 %412, %v351
        %v414 = vpop.permute.xlu0 %413
        %417 = vset.pattern.permute.xlu0 0
        %418 = vperm.xlu0 %417, %v352
        %v419 = vpop.permute.xlu0 %418
        %422 = vset.pattern.permute.xlu0 0
        %423 = vperm.xlu0 %422, %v353
        %v424 = vpop.permute.xlu0 %423
        %427 = vset.pattern.permute.xlu0 0
        %428 = vperm.xlu0 %427, %v354
        %v429 = vpop.permute.xlu0 %428
        %432 = vset.pattern.permute.xlu0 0
        %433 = vperm.xlu0 %432, %v355
        %v434 = vpop.permute.xlu0 %433
        %v452 = vunpack.c.l.b16 %v324
        %v453 = vunpack.c.l.b16 %v325
        %v454 = vunpack.c.l.b16 %v326
        %v455 = vunpack.c.l.b16 %v327
        %v456 = vunpack.c.l.b16 %v328
        %v457 = vunpack.c.l.b16 %v329
        %v458 = vunpack.c.l.b16 %v330
        %v459 = vunpack.c.l.b16 %v331
        %v460 = vunpack.c.l.b16 %v332
        %v461 = vunpack.c.l.b16 %v333
        %v462 = vunpack.c.l.b16 %v334
        %v463 = vunpack.c.l.b16 %v335
        %v464 = vunpack.c.l.b16 %v336
        %v465 = vunpack.c.l.b16 %v337
        %v466 = vunpack.c.l.b16 %v338
        %v467 = vunpack.c.l.b16 %v339
        %v468 = vpack.c.b16 %v453, %v452
        %v469 = vpack.c.b16 %v455, %v454
        %v470 = vpack.c.b16 %v457, %v456
        %v471 = vpack.c.b16 %v459, %v458
        %v472 = vpack.c.b16 %v461, %v460
        %v473 = vpack.c.b16 %v463, %v462
        %v474 = vpack.c.b16 %v465, %v464
        %v475 = vpack.c.b16 %v467, %v466
        %v516 = vunpack.c.l.b16 %v292
        %v517 = vunpack.c.l.b16 %v293
        %v518 = vunpack.c.l.b16 %v294
        %v519 = vunpack.c.l.b16 %v295
        %v520 = vunpack.c.l.b16 %v296
        %v521 = vunpack.c.l.b16 %v297
        %v522 = vunpack.c.l.b16 %v298
        %v523 = vunpack.c.l.b16 %v299
        %v524 = vunpack.c.l.b16 %v300
        %v525 = vunpack.c.l.b16 %v301
        %v526 = vunpack.c.l.b16 %v302
        %v527 = vunpack.c.l.b16 %v303
        %v528 = vunpack.c.l.b16 %v304
        %v529 = vunpack.c.l.b16 %v305
        %v530 = vunpack.c.l.b16 %v306
        %v531 = vunpack.c.l.b16 %v307
        %v532 = vunpack.c.l.b16 %v308
        %v533 = vunpack.c.l.b16 %v309
        %v534 = vunpack.c.l.b16 %v310
        %v535 = vunpack.c.l.b16 %v311
        %v536 = vunpack.c.l.b16 %v312
        %v537 = vunpack.c.l.b16 %v313
        %v538 = vunpack.c.l.b16 %v314
        %v539 = vunpack.c.l.b16 %v315
        %v540 = vunpack.c.l.b16 %v316
        %v541 = vunpack.c.l.b16 %v317
        %v542 = vunpack.c.l.b16 %v318
        %v543 = vunpack.c.l.b16 %v319
        %v544 = vunpack.c.l.b16 %v320
        %v545 = vunpack.c.l.b16 %v321
        %v546 = vunpack.c.l.b16 %v322
        %v547 = vunpack.c.l.b16 %v323
        %v548 = vpack.c.b16 %v517, %v516
        %v549 = vpack.c.b16 %v519, %v518
        %v550 = vpack.c.b16 %v521, %v520
        %v551 = vpack.c.b16 %v523, %v522
        %v552 = vpack.c.b16 %v525, %v524
        %v553 = vpack.c.b16 %v527, %v526
        %v554 = vpack.c.b16 %v529, %v528
        %v555 = vpack.c.b16 %v531, %v530
        %v556 = vpack.c.b16 %v533, %v532
        %v557 = vpack.c.b16 %v535, %v534
        %v558 = vpack.c.b16 %v537, %v536
        %v559 = vpack.c.b16 %v539, %v538
        %v560 = vpack.c.b16 %v541, %v540
        %v561 = vpack.c.b16 %v543, %v542
        %v562 = vpack.c.b16 %v545, %v544
        %v563 = vpack.c.b16 %v547, %v546
        %580 = vmatprep.subr.bf16.mxu0 0
        %581 = vmatpush1.bf16.xpose.msra.mxu0 %v555
        %582 = vmatprep.subr.bf16.mxu0 0
        %583 = vmatpush1.bf16.xpose.msra.mxu0 %v554
        %584 = vmatprep.subr.bf16.mxu0 0
        %585 = vmatpush1.bf16.xpose.msra.mxu0 %v553
        %586 = vmatprep.subr.bf16.mxu0 0
        %587 = vmatpush1.bf16.xpose.msra.mxu0 %v552
        %588 = vmatprep.subr.bf16.mxu0 0
        %589 = vmatpush1.bf16.xpose.msra.mxu0 %v551
        %590 = vmatprep.subr.bf16.mxu0 0
        %591 = vmatpush1.bf16.xpose.msra.mxu0 %v550
        %592 = vmatprep.subr.bf16.mxu0 0
        %593 = vmatpush1.bf16.xpose.msra.mxu0 %v549
        %594 = vmatprep.subr.bf16.mxu0 0
        %595 = vmatpush1.bf16.xpose.msra.mxu0 %v548
        %596 = vmatprep.subr.bf16.mxu0 0
        %597 = vmatpush2.bf16.xpose.msra.mxu0 %v563
        %598 = vmatprep.subr.bf16.mxu0 0
        %599 = vmatpush2.bf16.xpose.msra.mxu0 %v562
        %600 = vmatprep.subr.bf16.mxu0 0
        %601 = vmatpush2.bf16.xpose.msra.mxu0 %v561
        %602 = vmatprep.subr.bf16.mxu0 0
        %603 = vmatpush2.bf16.xpose.msra.mxu0 %v560
        %604 = vmatprep.subr.bf16.mxu0 0
        %605 = vmatpush2.bf16.xpose.msra.mxu0 %v559
        %606 = vmatprep.subr.bf16.mxu0 0
        %607 = vmatpush2.bf16.xpose.msra.mxu0 %v558
        %608 = vmatprep.subr.bf16.mxu0 0
        %609 = vmatpush2.bf16.xpose.msra.mxu0 %v557
        %610 = vmatprep.subr.bf16.mxu0 0
        %611 = vmatpush2.bf16.xpose.msra.mxu0 %v556
        %612 = vmatprep.mubr.bf16.mxu0 0
        %613 = vmatmul.mubr.bf16.gmra.mxu0 %v468
        %v614 = vpop.f32.mrf.mxu0
        %v615 = vadd.f32 %v359, %v614
        %v616 = vpop.f32.mrf.mxu0
        %v617 = vadd.f32 %v359, %v616
        %v618 = vpop.f32.mrf.mxu0
        %v619 = vadd.f32 %v364, %v618
        %v620 = vpop.f32.mrf.mxu0
        %v621 = vadd.f32 %v364, %v620
        %622 = vmatprep.mubr.bf16.mxu0 0
        %623 = vmatmul.mubr.bf16.gmra.mxu0 %v469
        %v624 = vpop.f32.mrf.mxu0
        %v625 = vadd.f32 %v369, %v624
        %v626 = vpop.f32.mrf.mxu0
        %v627 = vadd.f32 %v369, %v626
        %v628 = vpop.f32.mrf.mxu0
        %v629 = vadd.f32 %v374, %v628
        %v630 = vpop.f32.mrf.mxu0
        %v631 = vadd.f32 %v374, %v630
        %632 = vmatprep.mubr.bf16.mxu0 0
        %633 = vmatmul.mubr.bf16.gmra.mxu0 %v470
        %v634 = vpop.f32.mrf.mxu0
        %v635 = vadd.f32 %v379, %v634
        %v636 = vpop.f32.mrf.mxu0
        %v637 = vadd.f32 %v379, %v636
        %v638 = vpop.f32.mrf.mxu0
        %v639 = vadd.f32 %v384, %v638
        %v640 = vpop.f32.mrf.mxu0
        %v641 = vadd.f32 %v384, %v640
        %642 = vmatprep.mubr.bf16.mxu0 0
        %643 = vmatmul.mubr.bf16.gmra.mxu0 %v471
        %v644 = vpop.f32.mrf.mxu0
        %v645 = vadd.f32 %v389, %v644
        %v646 = vpop.f32.mrf.mxu0
        %v647 = vadd.f32 %v389, %v646
        %v648 = vpop.f32.mrf.mxu0
        %v649 = vadd.f32 %v394, %v648
        %v650 = vpop.f32.mrf.mxu0
        %v651 = vadd.f32 %v394, %v650
        %652 = vmatprep.mubr.bf16.mxu0 0
        %653 = vmatmul.mubr.bf16.gmra.mxu0 %v472
        %v654 = vpop.f32.mrf.mxu0
        %v655 = vadd.f32 %v399, %v654
        %v656 = vpop.f32.mrf.mxu0
        %v657 = vadd.f32 %v399, %v656
        %v658 = vpop.f32.mrf.mxu0
        %v659 = vadd.f32 %v404, %v658
        %v660 = vpop.f32.mrf.mxu0
        %v661 = vadd.f32 %v404, %v660
        %662 = vmatprep.mubr.bf16.mxu0 0
        %663 = vmatmul.mubr.bf16.gmra.mxu0 %v473
        %v664 = vpop.f32.mrf.mxu0
        %v665 = vadd.f32 %v409, %v664
        %v666 = vpop.f32.mrf.mxu0
        %v667 = vadd.f32 %v409, %v666
        %v668 = vpop.f32.mrf.mxu0
        %v669 = vadd.f32 %v414, %v668
        %v670 = vpop.f32.mrf.mxu0
        %v671 = vadd.f32 %v414, %v670
        %672 = vmatprep.mubr.bf16.mxu0 0
        %673 = vmatmul.mubr.bf16.gmra.mxu0 %v474
        %v674 = vpop.f32.mrf.mxu0
        %v675 = vadd.f32 %v419, %v674
        %v676 = vpop.f32.mrf.mxu0
        %v677 = vadd.f32 %v419, %v676
        %v678 = vpop.f32.mrf.mxu0
        %v679 = vadd.f32 %v424, %v678
        %v680 = vpop.f32.mrf.mxu0
        %v681 = vadd.f32 %v424, %v680
        %682 = vmatprep.mubr.bf16.mxu0 0
        %683 = vmatmul.mubr.bf16.gmra.mxu0 %v475
        %v684 = vpop.f32.mrf.mxu0
        %v685 = vadd.f32 %v429, %v684
        %v686 = vpop.f32.mrf.mxu0
        %v687 = vadd.f32 %v429, %v686
        %v688 = vpop.f32.mrf.mxu0
        %v689 = vadd.f32 %v434, %v688
        %v690 = vpop.f32.mrf.mxu0
        %v691 = vadd.f32 %v434, %v690
        %692 = vdwg.mxu0
        %v693 = vld [vmem:[#allocation5] sm:$0xf]
        %v694 = vld [vmem:[#allocation5 + $0x4] sm:$0xf]
        %v695 = vld [vmem:[#allocation5 + $0x8] sm:$0xf]
        %v696 = vld [vmem:[#allocation5 + $0xc] sm:$0xf]
        %v697 = vld [vmem:[#allocation5 + $0x10] sm:$0xf]
        %v698 = vld [vmem:[#allocation5 + $0x14] sm:$0xf]
        %v699 = vld [vmem:[#allocation5 + $0x18] sm:$0xf]
        %v700 = vld [vmem:[#allocation5 + $0x1c] sm:$0xf]
        %v701 = vld [vmem:[#allocation5 + $0x20] sm:$0xf]
        %v702 = vld [vmem:[#allocation5 + $0x24] sm:$0xf]
        %v703 = vld [vmem:[#allocation5 + $0x28] sm:$0xf]
        %v704 = vld [vmem:[#allocation5 + $0x2c] sm:$0xf]
        %v705 = vld [vmem:[#allocation5 + $0x30] sm:$0xf]
        %v706 = vld [vmem:[#allocation5 + $0x34] sm:$0xf]
        %v707 = vld [vmem:[#allocation5 + $0x38] sm:$0xf]
        %v708 = vld [vmem:[#allocation5 + $0x3c] sm:$0xf]
        %v709 = vld [vmem:[%s4] sm:$0xff]
        %v710 = vld [vmem:[%s4 + $0x8] sm:$0xff]
        %v711 = vld [vmem:[%s4 + $0x10] sm:$0xff]
        %v712 = vld [vmem:[%s4 + $0x18] sm:$0xff]
        %v713 = vld [vmem:[%s4 + $0x20] sm:$0xff]
        %v714 = vld [vmem:[%s4 + $0x28] sm:$0xff]
        %v715 = vld [vmem:[%s4 + $0x30] sm:$0xff]
        %v716 = vld [vmem:[%s4 + $0x38] sm:$0xff]
        %v717 = vld [vmem:[%s4 + $0x40] sm:$0xff]
        %v718 = vld [vmem:[%s4 + $0x48] sm:$0xff]
        %v719 = vld [vmem:[%s4 + $0x50] sm:$0xff]
        %v720 = vld [vmem:[%s4 + $0x58] sm:$0xff]
        %v721 = vld [vmem:[%s4 + $0x60] sm:$0xff]
        %v722 = vld [vmem:[%s4 + $0x68] sm:$0xff]
        %v723 = vld [vmem:[%s4 + $0x70] sm:$0xff]
        %v724 = vld [vmem:[%s4 + $0x78] sm:$0xff]
        %726 = vset.pattern.permute.xlu0 0
        %727 = vperm.xlu0 %726, %v709
        %v728 = vpop.permute.xlu0 %727
        %731 = vset.pattern.permute.xlu0 0
        %732 = vperm.xlu0 %731, %v710
        %v733 = vpop.permute.xlu0 %732
        %736 = vset.pattern.permute.xlu0 0
        %737 = vperm.xlu0 %736, %v711
        %v738 = vpop.permute.xlu0 %737
        %741 = vset.pattern.permute.xlu0 0
        %742 = vperm.xlu0 %741, %v712
        %v743 = vpop.permute.xlu0 %742
        %746 = vset.pattern.permute.xlu0 0
        %747 = vperm.xlu0 %746, %v713
        %v748 = vpop.permute.xlu0 %747
        %751 = vset.pattern.permute.xlu0 0
        %752 = vperm.xlu0 %751, %v714
        %v753 = vpop.permute.xlu0 %752
        %756 = vset.pattern.permute.xlu0 0
        %757 = vperm.xlu0 %756, %v715
        %v758 = vpop.permute.xlu0 %757
        %761 = vset.pattern.permute.xlu0 0
        %762 = vperm.xlu0 %761, %v716
        %v763 = vpop.permute.xlu0 %762
        %766 = vset.pattern.permute.xlu0 0
        %767 = vperm.xlu0 %766, %v717
        %v768 = vpop.permute.xlu0 %767
        %771 = vset.pattern.permute.xlu0 0
        %772 = vperm.xlu0 %771, %v718
        %v773 = vpop.permute.xlu0 %772
        %776 = vset.pattern.permute.xlu0 0
        %777 = vperm.xlu0 %776, %v719
        %v778 = vpop.permute.xlu0 %777
        %781 = vset.pattern.permute.xlu0 0
        %782 = vperm.xlu0 %781, %v720
        %v783 = vpop.permute.xlu0 %782
        %786 = vset.pattern.permute.xlu0 0
        %787 = vperm.xlu0 %786, %v721
        %v788 = vpop.permute.xlu0 %787
        %791 = vset.pattern.permute.xlu0 0
        %792 = vperm.xlu0 %791, %v722
        %v793 = vpop.permute.xlu0 %792
        %796 = vset.pattern.permute.xlu0 0
        %797 = vperm.xlu0 %796, %v723
        %v798 = vpop.permute.xlu0 %797
        %801 = vset.pattern.permute.xlu0 0
        %802 = vperm.xlu0 %801, %v724
        %v803 = vpop.permute.xlu0 %802
        %v821 = vunpack.c.l.b16 %v693
        %v822 = vunpack.c.l.b16 %v694
        %v823 = vunpack.c.l.b16 %v695
        %v824 = vunpack.c.l.b16 %v696
        %v825 = vunpack.c.l.b16 %v697
        %v826 = vunpack.c.l.b16 %v698
        %v827 = vunpack.c.l.b16 %v699
        %v828 = vunpack.c.l.b16 %v700
        %v829 = vunpack.c.l.b16 %v701
        %v830 = vunpack.c.l.b16 %v702
        %v831 = vunpack.c.l.b16 %v703
        %v832 = vunpack.c.l.b16 %v704
        %v833 = vunpack.c.l.b16 %v705
        %v834 = vunpack.c.l.b16 %v706
        %v835 = vunpack.c.l.b16 %v707
        %v836 = vunpack.c.l.b16 %v708
        %v837 = vpack.c.b16 %v822, %v821
        %v838 = vpack.c.b16 %v824, %v823
        %v839 = vpack.c.b16 %v826, %v825
        %v840 = vpack.c.b16 %v828, %v827
        %v841 = vpack.c.b16 %v830, %v829
        %v842 = vpack.c.b16 %v832, %v831
        %v843 = vpack.c.b16 %v834, %v833
        %v844 = vpack.c.b16 %v836, %v835
        %853 = vmatprep.subr.bf16.mxu0 0
        %854 = vmatpush1.bf16.xpose.msra.mxu0 %v555
        %855 = vmatprep.subr.bf16.mxu0 0
        %856 = vmatpush1.bf16.xpose.msra.mxu0 %v554
        %857 = vmatprep.subr.bf16.mxu0 0
        %858 = vmatpush1.bf16.xpose.msra.mxu0 %v553
        %859 = vmatprep.subr.bf16.mxu0 0
        %860 = vmatpush1.bf16.xpose.msra.mxu0 %v552
        %861 = vmatprep.subr.bf16.mxu0 0
        %862 = vmatpush1.bf16.xpose.msra.mxu0 %v551
        %863 = vmatprep.subr.bf16.mxu0 0
        %864 = vmatpush1.bf16.xpose.msra.mxu0 %v550
        %865 = vmatprep.subr.bf16.mxu0 0
        %866 = vmatpush1.bf16.xpose.msra.mxu0 %v549
        %867 = vmatprep.subr.bf16.mxu0 0
        %868 = vmatpush1.bf16.xpose.msra.mxu0 %v548
        %869 = vmatprep.subr.bf16.mxu0 0
        %870 = vmatpush2.bf16.xpose.msra.mxu0 %v563
        %871 = vmatprep.subr.bf16.mxu0 0
        %872 = vmatpush2.bf16.xpose.msra.mxu0 %v562
        %873 = vmatprep.subr.bf16.mxu0 0
        %874 = vmatpush2.bf16.xpose.msra.mxu0 %v561
        %875 = vmatprep.subr.bf16.mxu0 0
        %876 = vmatpush2.bf16.xpose.msra.mxu0 %v560
        %877 = vmatprep.subr.bf16.mxu0 0
        %878 = vmatpush2.bf16.xpose.msra.mxu0 %v559
        %879 = vmatprep.subr.bf16.mxu0 0
        %880 = vmatpush2.bf16.xpose.msra.mxu0 %v558
        %881 = vmatprep.subr.bf16.mxu0 0
        %882 = vmatpush2.bf16.xpose.msra.mxu0 %v557
        %883 = vmatprep.subr.bf16.mxu0 0
        %884 = vmatpush2.bf16.xpose.msra.mxu0 %v556
        %885 = vmatprep.mubr.bf16.mxu0 0
        %886 = vmatmul.mubr.bf16.gmra.mxu0 %v837
        %v887 = vpop.f32.mrf.mxu0
        %v888 = vadd.f32 %v728, %v887
        %v889 = vpop.f32.mrf.mxu0
        %v890 = vadd.f32 %v728, %v889
        %v891 = vpop.f32.mrf.mxu0
        %v892 = vadd.f32 %v733, %v891
        %v893 = vpop.f32.mrf.mxu0
        %v894 = vadd.f32 %v733, %v893
        %895 = vmatprep.mubr.bf16.mxu0 0
        %896 = vmatmul.mubr.bf16.gmra.mxu0 %v838
        %v897 = vpop.f32.mrf.mxu0
        %v898 = vadd.f32 %v738, %v897
        %v899 = vpop.f32.mrf.mxu0
        %v900 = vadd.f32 %v738, %v899
        %v901 = vpop.f32.mrf.mxu0
        %v902 = vadd.f32 %v743, %v901
        %v903 = vpop.f32.mrf.mxu0
        %v904 = vadd.f32 %v743, %v903
        %905 = vmatprep.mubr.bf16.mxu0 0
        %906 = vmatmul.mubr.bf16.gmra.mxu0 %v839
        %v907 = vpop.f32.mrf.mxu0
        %v908 = vadd.f32 %v748, %v907
        %v909 = vpop.f32.mrf.mxu0
        %v910 = vadd.f32 %v748, %v909
        %v911 = vpop.f32.mrf.mxu0
        %v912 = vadd.f32 %v753, %v911
        %v913 = vpop.f32.mrf.mxu0
        %v914 = vadd.f32 %v753, %v913
        %915 = vmatprep.mubr.bf16.mxu0 0
        %916 = vmatmul.mubr.bf16.gmra.mxu0 %v840
        %v917 = vpop.f32.mrf.mxu0
        %v918 = vadd.f32 %v758, %v917
        %v919 = vpop.f32.mrf.mxu0
        %v920 = vadd.f32 %v758, %v919
        %v921 = vpop.f32.mrf.mxu0
        %v922 = vadd.f32 %v763, %v921
        %v923 = vpop.f32.mrf.mxu0
        %v924 = vadd.f32 %v763, %v923
        %925 = vmatprep.mubr.bf16.mxu0 0
        %926 = vmatmul.mubr.bf16.gmra.mxu0 %v841
        %v927 = vpop.f32.mrf.mxu0
        %v928 = vadd.f32 %v768, %v927
        %v929 = vpop.f32.mrf.mxu0
        %v930 = vadd.f32 %v768, %v929
        %v931 = vpop.f32.mrf.mxu0
        %v932 = vadd.f32 %v773, %v931
        %v933 = vpop.f32.mrf.mxu0
        %v934 = vadd.f32 %v773, %v933
        %935 = vmatprep.mubr.bf16.mxu0 0
        %936 = vmatmul.mubr.bf16.gmra.mxu0 %v842
        %v937 = vpop.f32.mrf.mxu0
        %v938 = vadd.f32 %v778, %v937
        %v939 = vpop.f32.mrf.mxu0
        %v940 = vadd.f32 %v778, %v939
        %v941 = vpop.f32.mrf.mxu0
        %v942 = vadd.f32 %v783, %v941
        %v943 = vpop.f32.mrf.mxu0
        %v944 = vadd.f32 %v783, %v943
        %945 = vmatprep.mubr.bf16.mxu0 0
        %946 = vmatmul.mubr.bf16.gmra.mxu0 %v843
        %v947 = vpop.f32.mrf.mxu0
        %v948 = vadd.f32 %v788, %v947
        %v949 = vpop.f32.mrf.mxu0
        %v950 = vadd.f32 %v788, %v949
        %v951 = vpop.f32.mrf.mxu0
        %v952 = vadd.f32 %v793, %v951
        %v953 = vpop.f32.mrf.mxu0
        %v954 = vadd.f32 %v793, %v953
        %955 = vmatprep.mubr.bf16.mxu0 0
        %956 = vmatmul.mubr.bf16.gmra.mxu0 %v844
        %v957 = vpop.f32.mrf.mxu0
        %v958 = vadd.f32 %v798, %v957
        %v959 = vpop.f32.mrf.mxu0
        %v960 = vadd.f32 %v798, %v959
        %v961 = vpop.f32.mrf.mxu0
        %v962 = vadd.f32 %v803, %v961
        %v963 = vpop.f32.mrf.mxu0
        %v964 = vadd.f32 %v803, %v963
        %965 = vdwg.mxu0
        %v966 = vpack.c.bf16 %v619, %v615
        %v967 = vpack.c.bf16 %v621, %v617
        %v968 = vpack.c.bf16 %v629, %v625
        %v969 = vpack.c.bf16 %v631, %v627
        %v970 = vpack.c.bf16 %v639, %v635
        %v971 = vpack.c.bf16 %v641, %v637
        %v972 = vpack.c.bf16 %v649, %v645
        %v973 = vpack.c.bf16 %v651, %v647
        %v974 = vpack.c.bf16 %v659, %v655
        %v975 = vpack.c.bf16 %v661, %v657
        %v976 = vpack.c.bf16 %v669, %v665
        %v977 = vpack.c.bf16 %v671, %v667
        %v978 = vpack.c.bf16 %v679, %v675
        %v979 = vpack.c.bf16 %v681, %v677
        %v980 = vpack.c.bf16 %v689, %v685
        %v981 = vpack.c.bf16 %v691, %v687
        %v998 = vunpack.c.l.b16 %v966
        %v999 = vunpack.c.l.b16 %v967
        %v1000 = vunpack.c.h.b16 %v966
        %v1001 = vunpack.c.h.b16 %v967
        %v1002 = vunpack.c.l.b16 %v968
        %v1003 = vunpack.c.l.b16 %v969
        %v1004 = vunpack.c.h.b16 %v968
        %v1005 = vunpack.c.h.b16 %v969
        %v1006 = vunpack.c.l.b16 %v970
        %v1007 = vunpack.c.l.b16 %v971
        %v1008 = vunpack.c.h.b16 %v970
        %v1009 = vunpack.c.h.b16 %v971
        %v1010 = vunpack.c.l.b16 %v972
        %v1011 = vunpack.c.l.b16 %v973
        %v1012 = vunpack.c.h.b16 %v972
        %v1013 = vunpack.c.h.b16 %v973
        %v1014 = vunpack.c.l.b16 %v974
        %v1015 = vunpack.c.l.b16 %v975
        %v1016 = vunpack.c.h.b16 %v974
        %v1017 = vunpack.c.h.b16 %v975
        %v1018 = vunpack.c.l.b16 %v976
        %v1019 = vunpack.c.l.b16 %v977
        %v1020 = vunpack.c.h.b16 %v976
        %v1021 = vunpack.c.h.b16 %v977
        %v1022 = vunpack.c.l.b16 %v978
        %v1023 = vunpack.c.l.b16 %v979
        %v1024 = vunpack.c.h.b16 %v978
        %v1025 = vunpack.c.h.b16 %v979
        %v1026 = vunpack.c.l.b16 %v980
        %v1027 = vunpack.c.l.b16 %v981
        %v1028 = vunpack.c.h.b16 %v980
        %v1029 = vunpack.c.h.b16 %v981
        %v1030 = vpack.c.b16 %v999, %v998
        %v1031 = vpack.c.b16 %v1001, %v1000
        %v1032 = vpack.c.b16 %v1003, %v1002
        %v1033 = vpack.c.b16 %v1005, %v1004
        %v1034 = vpack.c.b16 %v1007, %v1006
        %v1035 = vpack.c.b16 %v1009, %v1008
        %v1036 = vpack.c.b16 %v1011, %v1010
        %v1037 = vpack.c.b16 %v1013, %v1012
        %v1038 = vpack.c.b16 %v1015, %v1014
        %v1039 = vpack.c.b16 %v1017, %v1016
        %v1040 = vpack.c.b16 %v1019, %v1018
        %v1041 = vpack.c.b16 %v1021, %v1020
        %v1042 = vpack.c.b16 %v1023, %v1022
        %v1043 = vpack.c.b16 %v1025, %v1024
        %v1044 = vpack.c.b16 %v1027, %v1026
        %v1045 = vpack.c.b16 %v1029, %v1028
        %1062 = vst [vmem:[%s278] sm:$0xff] %v1030
        %1063 = vst [vmem:[%s278 + $0x8] sm:$0xff] %v1031
        %1064 = vst [vmem:[%s278 + $0x10] sm:$0xff] %v1032
        %1065 = vst [vmem:[%s278 + $0x18] sm:$0xff] %v1033
        %1066 = vst [vmem:[%s278 + $0x20] sm:$0xff] %v1034
        %1067 = vst [vmem:[%s278 + $0x28] sm:$0xff] %v1035
        %1068 = vst [vmem:[%s278 + $0x30] sm:$0xff] %v1036
        %1069 = vst [vmem:[%s278 + $0x38] sm:$0xff] %v1037
        %1070 = vst [vmem:[%s278 + $0x40] sm:$0xff] %v1038
        %1071 = vst [vmem:[%s278 + $0x48] sm:$0xff] %v1039
        %1072 = vst [vmem:[%s278 + $0x50] sm:$0xff] %v1040
        %1073 = vst [vmem:[%s278 + $0x58] sm:$0xff] %v1041
        %1074 = vst [vmem:[%s278 + $0x60] sm:$0xff] %v1042
        %1075 = vst [vmem:[%s278 + $0x68] sm:$0xff] %v1043
        %1076 = vst [vmem:[%s278 + $0x70] sm:$0xff] %v1044
        %1077 = vst [vmem:[%s278 + $0x78] sm:$0xff] %v1045
        %v1078 = vpack.c.bf16 %v892, %v888
        %v1079 = vpack.c.bf16 %v894, %v890
        %v1080 = vpack.c.bf16 %v902, %v898
        %v1081 = vpack.c.bf16 %v904, %v900
        %v1082 = vpack.c.bf16 %v912, %v908
        %v1083 = vpack.c.bf16 %v914, %v910
        %v1084 = vpack.c.bf16 %v922, %v918
        %v1085 = vpack.c.bf16 %v924, %v920
        %v1086 = vpack.c.bf16 %v932, %v928
        %v1087 = vpack.c.bf16 %v934, %v930
        %v1088 = vpack.c.bf16 %v942, %v938
        %v1089 = vpack.c.bf16 %v944, %v940
        %v1090 = vpack.c.bf16 %v952, %v948
        %v1091 = vpack.c.bf16 %v954, %v950
        %v1092 = vpack.c.bf16 %v962, %v958
        %v1093 = vpack.c.bf16 %v964, %v960
        %v1110 = vunpack.c.l.b16 %v1078
        %v1111 = vunpack.c.l.b16 %v1079
        %v1112 = vunpack.c.h.b16 %v1078
        %v1113 = vunpack.c.h.b16 %v1079
        %v1114 = vunpack.c.l.b16 %v1080
        %v1115 = vunpack.c.l.b16 %v1081
        %v1116 = vunpack.c.h.b16 %v1080
        %v1117 = vunpack.c.h.b16 %v1081
        %v1118 = vunpack.c.l.b16 %v1082
        %v1119 = vunpack.c.l.b16 %v1083
        %v1120 = vunpack.c.h.b16 %v1082
        %v1121 = vunpack.c.h.b16 %v1083
        %v1122 = vunpack.c.l.b16 %v1084
        %v1123 = vunpack.c.l.b16 %v1085
        %v1124 = vunpack.c.h.b16 %v1084
        %v1125 = vunpack.c.h.b16 %v1085
        %v1126 = vunpack.c.l.b16 %v1086
        %v1127 = vunpack.c.l.b16 %v1087
        %v1128 = vunpack.c.h.b16 %v1086
        %v1129 = vunpack.c.h.b16 %v1087
        %v1130 = vunpack.c.l.b16 %v1088
        %v1131 = vunpack.c.l.b16 %v1089
        %v1132 = vunpack.c.h.b16 %v1088
        %v1133 = vunpack.c.h.b16 %v1089
        %v1134 = vunpack.c.l.b16 %v1090
        %v1135 = vunpack.c.l.b16 %v1091
        %v1136 = vunpack.c.h.b16 %v1090
        %v1137 = vunpack.c.h.b16 %v1091
        %v1138 = vunpack.c.l.b16 %v1092
        %v1139 = vunpack.c.l.b16 %v1093
        %v1140 = vunpack.c.h.b16 %v1092
        %v1141 = vunpack.c.h.b16 %v1093
        %v1142 = vpack.c.b16 %v1111, %v1110
        %v1143 = vpack.c.b16 %v1113, %v1112
        %v1144 = vpack.c.b16 %v1115, %v1114
        %v1145 = vpack.c.b16 %v1117, %v1116
        %v1146 = vpack.c.b16 %v1119, %v1118
        %v1147 = vpack.c.b16 %v1121, %v1120
        %v1148 = vpack.c.b16 %v1123, %v1122
        %v1149 = vpack.c.b16 %v1125, %v1124
        %v1150 = vpack.c.b16 %v1127, %v1126
        %v1151 = vpack.c.b16 %v1129, %v1128
        %v1152 = vpack.c.b16 %v1131, %v1130
        %v1153 = vpack.c.b16 %v1133, %v1132
        %v1154 = vpack.c.b16 %v1135, %v1134
        %v1155 = vpack.c.b16 %v1137, %v1136
        %v1156 = vpack.c.b16 %v1139, %v1138
        %v1157 = vpack.c.b16 %v1141, %v1140
        %1174 = vst [vmem:[%s285] sm:$0xff] %v1142
        %1175 = vst [vmem:[%s285 + $0x8] sm:$0xff] %v1143
        %1176 = vst [vmem:[%s285 + $0x10] sm:$0xff] %v1144
        %1177 = vst [vmem:[%s285 + $0x18] sm:$0xff] %v1145
        %1178 = vst [vmem:[%s285 + $0x20] sm:$0xff] %v1146
        %1179 = vst [vmem:[%s285 + $0x28] sm:$0xff] %v1147
        %1180 = vst [vmem:[%s285 + $0x30] sm:$0xff] %v1148
        %1181 = vst [vmem:[%s285 + $0x38] sm:$0xff] %v1149
        %1182 = vst [vmem:[%s285 + $0x40] sm:$0xff] %v1150
        %1183 = vst [vmem:[%s285 + $0x48] sm:$0xff] %v1151
        %1184 = vst [vmem:[%s285 + $0x50] sm:$0xff] %v1152
        %1185 = vst [vmem:[%s285 + $0x58] sm:$0xff] %v1153
        %1186 = vst [vmem:[%s285 + $0x60] sm:$0xff] %v1154
        %1187 = vst [vmem:[%s285 + $0x68] sm:$0xff] %v1155
        %1188 = vst [vmem:[%s285 + $0x70] sm:$0xff] %v1156
        %1189 = vst [vmem:[%s285 + $0x78] sm:$0xff] %v1157
        %s1190 = sand.u32 %s144, 1
        %s1191 = scalar_lea.sflag [#allocation4], %s1190
        %s1192 = sand.u32 %s144, 1
        %s1193 = smul.addr %s1192, 128
        %s1194 = scalar_lea.vmem [#allocation7], %s1193
        %s1195 = sand.u32 %s170, 1
        %s1196 = scalar_lea.sflag [#allocation9], %s1195
        %s1197 = sand.u32 %s170, 1
        %s1198 = smul.addr %s1197, 128
        %s1199 = scalar_lea.vmem [#allocation8], %s1198
        // Predicated region
        $region49: #{tpu_custom_call.1} parent=39 // pred_check
          %p1200 = pneg %p154
        $region50: #{tpu_custom_call.1} parent=39 // pred_check_branch
          %1202 = sbr.rel (%p1200) target = $region52
        $region51: #{tpu_custom_call.1} parent=39 // pred_region
          %s1204 = ssub.s32 2048, 2048
          %1205 = vsyncadd %s1191, %s1204
          %s1206 = smul.addr %s26, 32
          %s1207 = smul.addr %s1206, 64
          %s1208 = scalar_lea.hbm %s5, %s1207
          %s1209 = sshll.u32 %s1194, 4
          %s1210 = int_to_ptr.vmem [resolvable:$true] %s1209
          %1215 = dma.vmem_to_hbm [thread:$0]  %s1210, 2048, %s1208, %s1191, 128, 128, 8
        $region52: #{tpu_custom_call.1} parent=39 // pred_fallthru
          _
        // Predicated region
        $region53: #{tpu_custom_call.1} parent=39 // pred_check
          %p1216 = pneg %p180
        $region54: #{tpu_custom_call.1} parent=39 // pred_check_branch
          %1218 = sbr.rel (%p1216) target = $region56
        $region55: #{tpu_custom_call.1} parent=39 // pred_region
          %s1220 = ssub.s32 2048, 2048
          %1221 = vsyncadd %s1196, %s1220
          %s1222 = smul.addr %s26, 32
          %s1223 = smul.addr %s1222, 64
          %s1224 = scalar_lea.hbm %s6, %s1223
          %s1225 = sshll.u32 %s1199, 4
          %s1226 = int_to_ptr.vmem [resolvable:$true] %s1225
          %1231 = dma.vmem_to_hbm [thread:$0]  %s1226, 2048, %s1224, %s1196, 128, 128, 8
        $region56: #{tpu_custom_call.1} parent=39 // pred_fallthru
          _
      $region40: #{tpu_custom_call.1} parent=5 // pred_fallthru
        _
      %p1232 = scmp.le.s32.totalorder 2, %s21
      // Predicated region
      $region57: #{tpu_custom_call.1} parent=5 // pred_check
        %p1233 = pneg %p1232
      $region58: #{tpu_custom_call.1} parent=5 // pred_check_branch
        %1235 = sbr.rel (%p1233) target = $region60
      $region59: #{tpu_custom_call.1} parent=5 // pred_region
        %s1236 = ssub.s32 %s21, 2
        // Predicated region
        $region61: #{tpu_custom_call.1} parent=59 // pred_check
          %p1237 = pneg %p160
        $region62: #{tpu_custom_call.1} parent=59 // pred_check_branch
          %1239 = sbr.rel (%p1237) target = $region64
        $region63: #{tpu_custom_call.1} parent=59 // pred_region
          %s1240 = sand.u32 %s145, 1
          %s1241 = scalar_lea.sflag [#allocation4], %s1240
          %s1242 = sand.u32 %s145, 1
          %s1243 = smul.addr %s1242, 128
          %s1244 = scalar_lea.vmem [#allocation7], %s1243
          %1245 = dma.done %s1241, 2048
        $region64: #{tpu_custom_call.1} parent=59 // pred_fallthru
          _
        // Predicated region
        $region65: #{tpu_custom_call.1} parent=59 // pred_check
          %p1246 = pneg %p186
        $region66: #{tpu_custom_call.1} parent=59 // pred_check_branch
          %1248 = sbr.rel (%p1246) target = $region68
        $region67: #{tpu_custom_call.1} parent=59 // pred_region
          %s1249 = sand.u32 %s171, 1
          %s1250 = scalar_lea.sflag [#allocation9], %s1249
          %s1251 = sand.u32 %s171, 1
          %s1252 = smul.addr %s1251, 128
          %s1253 = scalar_lea.vmem [#allocation8], %s1252
          %1254 = dma.done %s1250, 2048
        $region68: #{tpu_custom_call.1} parent=59 // pred_fallthru
          _
      $region60: #{tpu_custom_call.1} parent=5 // pred_fallthru
        _
    $region6: #{tpu_custom_call.1} parent=1 // loop_footer
      %s25 = sadd.s32 1, %s21
    $region7: #{tpu_custom_call.1} parent=1 // loop_footer_branch
      %20 = sbr.rel target = $region3
    $region8: #{tpu_custom_call.1} parent=1 // loop_exit
      _
    %1255 = vsyncpa [#allocation3], 1
    %s1256 = scalar_lea.sflag [#allocation3], 1
    %1257 = vsyncpa %s1256, 1
    %1258 = vsyncpa [#allocation6], 1
    %1259 = vsyncpa [#allocation4], 1
    %s1260 = scalar_lea.sflag [#allocation4], 1
    %1261 = vsyncpa %s1260, 1
    %1262 = vsyncpa [#allocation9], 1
    %s1263 = scalar_lea.sflag [#allocation9], 1
    %1264 = vsyncpa %s1263, 1

</llo_original>
